<compile_context>
chip_gen: v7x
topology: tpu7x:2x2x1
jax: 0.10.0
libtpu: 0.0.40
codegen_flags: <defaults>
</compile_context>

<pallas_src>
import functools

import jax
import jax.numpy as jnp
from jax.experimental import pallas as pl
from jax.experimental.pallas import tpu as pltpu


# ----------------------------- Pallas kernel --------------------------------
def lstm_last_sigmoid_kernel(x_ref, wih_ref, whh_ref, b_ref, out_ref, *, T, B):
    """LSTM recurrence over T (small, static) timesteps, fully in VMEM.

    x_ref  : (T, B, Dp)   bf16, time-major, padded input
    wih_ref: (Dp, 4*Hp)   bf16, fused input->gate weights, gate order (i, f, o, g)
    whh_ref: (Hp, 4*Hp)   bf16, fused hidden->gate weights, same gate order
    b_ref  : (1, 4*Hp)    f32, fused bias (bias_ih + bias_hh)
    out_ref: (B, Hp)      f32, sigmoid(h_T)
    """
    Hp = whh_ref.shape[0]

    # Hoisted input projection + bias: one well-shaped bf16 matmul (f32 acc) for
    # all timesteps.  (T, B, Dp) -> (T*B, Dp) is a leading-dim merge.
    x_all = x_ref[...].reshape(T * B, -1)
    x_proj = (
        jnp.dot(x_all, wih_ref[...], preferred_element_type=jnp.float32)
        + b_ref[...]
    )                                                        # (T*B, 4*Hp) f32

    def gates_to_hc(gates, c_prev):
        # Gate order (i, f, o, g): one sigmoid over a contiguous 3*Hp slab,
        # one tanh over the last Hp slab -> 2 EUP pushes per step.
        sig = jax.nn.sigmoid(gates[:, : 3 * Hp])             # (B, 3*Hp)
        i = sig[:, 0 * Hp:1 * Hp]
        f = sig[:, 1 * Hp:2 * Hp]
        o = sig[:, 2 * Hp:3 * Hp]
        g = jnp.tanh(gates[:, 3 * Hp:])
        c = i * g if c_prev is None else f * c_prev + i * g   # peel: skip f*0
        h = o * jnp.tanh(c)
        return h, c

    # t = 0 peeled: h0 = c0 = 0 -> no h @ W_hh matmul, no f*c term.
    h, c = gates_to_hc(x_proj[:B, :], None)

    # Remaining timesteps: the only matmul left on the serial h->h path.
    # whh_ref[...] is used inline (single use) so Mosaic streams the RHS.
    for t in range(1, T):
        gates = x_proj[t * B:(t + 1) * B, :] + jnp.dot(
            h.astype(whh_ref.dtype), whh_ref[...],
            preferred_element_type=jnp.float32)               # (B, 4*Hp) f32
        h, c = gates_to_hc(gates, c)

    out_ref[...] = jax.nn.sigmoid(h).astype(out_ref.dtype)   # lane-dense (B, 128)


# ------------------------------- wrapper -------------------------------------
@functools.partial(jax.jit, static_argnames=("window_size", "hidden_size"))
def jsb_chorales_forward(x, params, window_size=2, hidden_size=88):
    """x: (B, window_size * 88) float32.  Returns (B, hidden_size) = sigmoid(h_T)."""
    wih_cat, whh_cat, b_cat = params                          # padded, fused
    B = x.shape[0]
    T = window_size
    D = x.shape[1] // T                                       # true input size (88)
    Dp = wih_cat.shape[0]                                     # padded input (128)
    Hp = whh_cat.shape[0]                                     # padded hidden (128)
    G = wih_cat.shape[1]                                      # 4 * Hp
    Bp = ((B + 7) // 8) * 8                                   # sublane-aligned batch

    # (B, T*D) -> (T, B, D) time-major, zero-pad to (T, Bp, Dp), cast to bf16.
    # NOTE: this relayout is a separate (tiny) XLA fusion before the kernel;
    # callers with a hot path should pass x pre-laid-out as (T, Bp, Dp) bf16.
    x_tm = jnp.transpose(x.reshape(B, T, D), (1, 0, 2))
    x_pad = jnp.zeros((T, Bp, Dp), wih_cat.dtype).at[:, :B, :D].set(
        x_tm.astype(wih_cat.dtype))

    # Advisory cost hint for XLA's scheduler around the custom call.
    itemsize_w = jnp.dtype(wih_cat.dtype).itemsize
    cost = pl.CostEstimate(
        flops=2 * T * Bp * Dp * G + 2 * (T - 1) * Bp * Hp * G,
        transcendentals=T * Bp * 5 * Hp + Bp * Hp,
        bytes_accessed=(wih_cat.size + whh_cat.size + x_pad.size) * itemsize_w
        + (b_cat.size + Bp * Hp) * 4,
    )

    kernel = functools.partial(lstm_last_sigmoid_kernel, T=T, B=Bp)
    vmem = pl.BlockSpec(memory_space=pltpu.MemorySpace.VMEM)
    out_pad = pl.pallas_call(
        kernel,
        out_shape=jax.ShapeDtypeStruct((Bp, Hp), jnp.float32),
        in_specs=[vmem, vmem, vmem, vmem],
        out_specs=vmem,
        cost_estimate=cost,
    )(x_pad, wih_cat, whh_cat, b_cat)

    return out_pad[:B, :hidden_size]


# --------------------------- parameter creation -------------------------------
def init_lstm_raw_params(key, input_size=88, hidden_size=88):
    """PyTorch-format LSTM params with U(-1/sqrt(H), 1/sqrt(H)) init."""
    H, D = hidden_size, input_size
    k = 1.0 / jnp.sqrt(jnp.float32(H))
    k1, k2, k3, k4 = jax.random.split(key, 4)
    weight_ih = jax.random.uniform(k1, (4 * H, D), jnp.float32, -k, k)
    weight_hh = jax.random.uniform(k2, (4 * H, H), jnp.float32, -k, k)
    bias_ih = jax.random.uniform(k3, (4 * H,), jnp.float32, -k, k)
    bias_hh = jax.random.uniform(k4, (4 * H,), jnp.float32, -k, k)
    return weight_ih, weight_hh, bias_ih, bias_hh


def pack_params(raw_params, input_size=88, hidden_size=88, d_pad=128, h_pad=128,
                weight_dtype=jnp.bfloat16):
    """Fuse gates, reorder to (i, f, o, g), pad to lane-aligned shapes.

    Returns:
      wih_cat: (d_pad, 4*h_pad)  bf16, x @ W layout, gate order (i, f, o, g)
      whh_cat: (h_pad, 4*h_pad)  bf16
      b_cat  : (1, 4*h_pad)      f32, bias_ih + bias_hh (same gate order)
    Padded rows/columns are zero, so padded hidden units remain exactly 0
    through the recurrence and never contaminate valid outputs.
    """
    weight_ih, weight_hh, bias_ih, bias_hh = raw_params
    H, D = hidden_size, input_size

    # Gate-separate (PyTorch order i, f, g, o) and transpose so the kernel
    # computes x @ W.
    wih_g = jnp.transpose(weight_ih.reshape(4, H, D), (0, 2, 1))   # (4, D, H)
    whh_g = jnp.transpose(weight_hh.reshape(4, H, H), (0, 2, 1))   # (4, H, H)
    b_g = (bias_ih + bias_hh).reshape(4, 1, H)                     # (4, 1, H)

    wih_p = jnp.zeros((4, d_pad, h_pad), jnp.float32).at[:, :D, :H].set(wih_g)
    whh_p = jnp.zeros((4, h_pad, h_pad), jnp.float32).at[:, :H, :H].set(whh_g)
    b_p = jnp.zeros((4, 1, h_pad), jnp.float32).at[:, :, :H].set(b_g)

    # Kernel gate order: (i, f, o, g) -> PyTorch indices (0, 1, 3, 2).
    order = (0, 1, 3, 2)
    wih_cat = jnp.concatenate([wih_p[g] for g in order], axis=-1)  # (Dp, 4*Hp)
    whh_cat = jnp.concatenate([whh_p[g] for g in order], axis=-1)  # (Hp, 4*Hp)
    b_cat = jnp.concatenate([b_p[g] for g in order], axis=-1)      # (1, 4*Hp)
    return (wih_cat.astype(weight_dtype), whh_cat.astype(weight_dtype),
            b_cat.astype(jnp.float32))


# ------------------------------ pure-JAX ref ----------------------------------
def reference_forward(x, raw_params, window_size=2, hidden_size=88):
    """Straight PyTorch-LSTM math from the raw (unpadded, unfused, f32) params."""
    weight_ih, weight_hh, bias_ih, bias_hh = raw_params
    B = x.shape[0]
    H = hidden_size
    x = x.reshape(B, window_size, -1)
    h = jnp.zeros((B, H), jnp.float32)
    c = jnp.zeros((B, H), jnp.float32)
    for t in range(window_size):
        xt = x[:, t, :]
        gates = xt @ weight_ih.T + h @ weight_hh.T + bias_ih + bias_hh  # (B, 4H)
        i = jax.nn.sigmoid(gates[:, 0 * H:1 * H])
        f = jax.nn.sigmoid(gates[:, 1 * H:2 * H])
        g = jnp.tanh(gates[:, 2 * H:3 * H])
        o = jax.nn.sigmoid(gates[:, 3 * H:4 * H])
        c = f * c + i * g
        h = o * jnp.tanh(c)
    return jax.nn.sigmoid(h)


# --------------------------------- main ---------------------------------------
if __name__ == "__main__":
    WINDOW = 2
    INPUT = 88
    HIDDEN = 88
    BATCH = 2

    key = jax.random.PRNGKey(0)
    k_param, k_x = jax.random.split(key)
    raw_params = init_lstm_raw_params(k_param, INPUT, HIDDEN)
    packed_params = pack_params(raw_params, INPUT, HIDDEN)

    # Input as the module receives it: (B, window_size * 88) before .view().
    x = jax.random.uniform(k_x, (BATCH, WINDOW * INPUT), jnp.float32)

    out = jsb_chorales_forward(x, packed_params, window_size=WINDOW,
                               hidden_size=HIDDEN)
    out = jax.block_until_ready(out)

    ref = reference_forward(x, raw_params, window_size=WINDOW, hidden_size=HIDDEN)
    assert out.shape == (BATCH, HIDDEN)
    # bf16 weight storage -> tolerance loosened vs. the f32 reference.
    assert jnp.allclose(out, ref, atol=1e-2, rtol=1e-2)

    print("KERNEL_OK")
</pallas_src>

<mosaic_0001>
module attributes {stable_mosaic.version = 11 : i64} {
  func.func @lstm_last_sigmoid_kernel(%arg0: memref<2x8x128xbf16, #tpu.memory_space<vmem>>, %arg1: memref<128x512xbf16, #tpu.memory_space<vmem>>, %arg2: memref<128x512xbf16, #tpu.memory_space<vmem>>, %arg3: memref<1x512xf32, #tpu.memory_space<vmem>>, %arg4: memref<8x128xf32, #tpu.memory_space<vmem>>) attributes {dimension_semantics = [], scalar_prefetch = 0 : i64, scratch_operands = 0 : i64, tpu.core_type = #tpu.core_type<tc>} {
    %c0 = arith.constant 0 : index
    %c0_0 = arith.constant 0 : index
    %c0_1 = arith.constant 0 : index
    %0 = vector.load %arg0[%c0, %c0_0, %c0_1] : memref<2x8x128xbf16, #tpu.memory_space<vmem>>, vector<2x8x128xbf16>
    %1 = vector.shape_cast %0 : vector<2x8x128xbf16> to vector<16x128xbf16>
    %c0_2 = arith.constant 0 : index
    %c0_3 = arith.constant 0 : index
    %2 = vector.load %arg1[%c0_2, %c0_3] : memref<128x512xbf16, #tpu.memory_space<vmem>>, vector<128x512xbf16>
    %cst = arith.constant dense<0.000000e+00> : vector<16x512xf32>
    %3 = tpu.matmul %1, %2, %cst {dimension_numbers = #tpu.dot_dimension_numbers<[1], [0], [0], [1], [0, 0, 1, 1], [], []>} : vector<16x128xbf16>, vector<128x512xbf16>, vector<16x512xf32> -> vector<16x512xf32>
    %c0_4 = arith.constant 0 : index
    %c0_5 = arith.constant 0 : index
    %4 = vector.load %arg3[%c0_4, %c0_5] : memref<1x512xf32, #tpu.memory_space<vmem>>, vector<1x512xf32>
    %5 = vector.broadcast %4 : vector<1x512xf32> to vector<16x512xf32>
    %6 = arith.addf %3, %5 : vector<16x512xf32>
    %7 = vector.extract_strided_slice %6 {offsets = [0, 0], sizes = [8, 512], strides = [1, 1]} : vector<16x512xf32> to vector<8x512xf32>
    %8 = vector.extract_strided_slice %7 {offsets = [0, 0], sizes = [8, 384], strides = [1, 1]} : vector<8x512xf32> to vector<8x384xf32>
    %9 = arith.negf %8 : vector<8x384xf32>
    %10 = math.exp %9 : vector<8x384xf32>
    %cst_6 = arith.constant 1.000000e+00 : f32
    %11 = vector.broadcast %cst_6 : f32 to vector<8x384xf32>
    %12 = arith.addf %11, %10 : vector<8x384xf32>
    %13 = arith.divf %11, %12 : vector<8x384xf32>
    %14 = vector.extract_strided_slice %13 {offsets = [0, 0], sizes = [8, 128], strides = [1, 1]} : vector<8x384xf32> to vector<8x128xf32>
    %15 = vector.extract_strided_slice %13 {offsets = [0, 256], sizes = [8, 128], strides = [1, 1]} : vector<8x384xf32> to vector<8x128xf32>
    %16 = vector.extract_strided_slice %7 {offsets = [0, 384], sizes = [8, 128], strides = [1, 1]} : vector<8x512xf32> to vector<8x128xf32>
    %17 = math.tanh %16 : vector<8x128xf32>
    %18 = arith.mulf %14, %17 : vector<8x128xf32>
    %19 = math.tanh %18 : vector<8x128xf32>
    %20 = arith.mulf %15, %19 : vector<8x128xf32>
    %21 = vector.extract_strided_slice %6 {offsets = [8, 0], sizes = [8, 512], strides = [1, 1]} : vector<16x512xf32> to vector<8x512xf32>
    %22 = arith.truncf %20 : vector<8x128xf32> to vector<8x128xbf16>
    %c0_7 = arith.constant 0 : index
    %c0_8 = arith.constant 0 : index
    %23 = vector.load %arg2[%c0_7, %c0_8] : memref<128x512xbf16, #tpu.memory_space<vmem>>, vector<128x512xbf16>
    %cst_9 = arith.constant dense<0.000000e+00> : vector<8x512xf32>
    %24 = tpu.matmul %22, %23, %cst_9 {dimension_numbers = #tpu.dot_dimension_numbers<[1], [0], [0], [1], [0, 0, 1, 1], [], []>} : vector<8x128xbf16>, vector<128x512xbf16>, vector<8x512xf32> -> vector<8x512xf32>
    %25 = arith.addf %21, %24 : vector<8x512xf32>
    %26 = vector.extract_strided_slice %25 {offsets = [0, 0], sizes = [8, 384], strides = [1, 1]} : vector<8x512xf32> to vector<8x384xf32>
    %27 = arith.negf %26 : vector<8x384xf32>
    %28 = math.exp %27 : vector<8x384xf32>
    %cst_10 = arith.constant 1.000000e+00 : f32
    %29 = vector.broadcast %cst_10 : f32 to vector<8x384xf32>
    %30 = arith.addf %29, %28 : vector<8x384xf32>
    %31 = arith.divf %29, %30 : vector<8x384xf32>
    %32 = vector.extract_strided_slice %31 {offsets = [0, 0], sizes = [8, 128], strides = [1, 1]} : vector<8x384xf32> to vector<8x128xf32>
    %33 = vector.extract_strided_slice %31 {offsets = [0, 128], sizes = [8, 128], strides = [1, 1]} : vector<8x384xf32> to vector<8x128xf32>
    %34 = vector.extract_strided_slice %31 {offsets = [0, 256], sizes = [8, 128], strides = [1, 1]} : vector<8x384xf32> to vector<8x128xf32>
    %35 = vector.extract_strided_slice %25 {offsets = [0, 384], sizes = [8, 128], strides = [1, 1]} : vector<8x512xf32> to vector<8x128xf32>
    %36 = math.tanh %35 : vector<8x128xf32>
    %37 = arith.mulf %33, %18 : vector<8x128xf32>
    %38 = arith.mulf %32, %36 : vector<8x128xf32>
    %39 = arith.addf %37, %38 : vector<8x128xf32>
    %40 = math.tanh %39 : vector<8x128xf32>
    %41 = arith.mulf %34, %40 : vector<8x128xf32>
    %42 = arith.negf %41 : vector<8x128xf32>
    %43 = math.exp %42 : vector<8x128xf32>
    %cst_11 = arith.constant 1.000000e+00 : f32
    %44 = vector.broadcast %cst_11 : f32 to vector<8x128xf32>
    %45 = arith.addf %44, %43 : vector<8x128xf32>
    %46 = arith.divf %44, %45 : vector<8x128xf32>
    %c0_12 = arith.constant 0 : index
    %c0_13 = arith.constant 0 : index
    %47 = vector.load %arg4[%c0_12, %c0_13] : memref<8x128xf32, #tpu.memory_space<vmem>>, vector<8x128xf32>
    tpu.vector_store %arg4[%c0_12, %c0_13], %46 {strides = array<i32>} : memref<8x128xf32, #tpu.memory_space<vmem>>, vector<8x128xf32>,
    return
  }
}

</mosaic_0001>

<llo_original>
// kernel: jsb_chorales_forward.1
$region0: #{jsb_chorales_forward.1}
  #allocation0 [shape = 'u32[]', space=smem, size = 0x4, offset = 0x4, fixed_abs, tag = 'smem constant byte address 0x4 - core index']
  #allocation1 [shape = 'u32[144,128]{1,0:T(1,128)}', space=vmem, size = 0x12000, scoped, tag = 'internal scratch']
  %s0 = inlined_call_operand.vmem [shape: bf16[2,8,128], index: 0, kind: input, shape index: {}]
  %s1 = inlined_call_operand.hbm [shape: bf16[128,512], index: 1, kind: input, shape index: {}]
  %s2 = inlined_call_operand.hbm [shape: bf16[128,512], index: 2, kind: input, shape index: {}]
  %s3 = inlined_call_operand.vmem [shape: f32[1,512], index: 3, kind: input, shape index: {}]
  %s4 = inlined_call_operand.vmem [shape: f32[8,128], index: 4, kind: output, shape index: {}]
  %s5 = sld [smem:[#allocation0]]
  $region34: #{jsb_chorales_forward.1} parent=0
    _
  %s7 = ssub.s32 1, %s5
  %s8 = scalar_select 0, %s7, %s5
  $region1: #{jsb_chorales_forward.1} parent=0
    #allocation2 [shape = 'u8[131072]{0}', space=vmem, size = 0x20000, scoped, tag = 'input window, operand 1, single buffered']
    #allocation3 [shape = 's32[1]{0}', space=sflag, size = 0x4, scoped, tag = 'scoped memory for jsb_chorales_forward.1']
    #allocation4 [shape = 'u8[131072]{0}', space=vmem, size = 0x20000, scoped, tag = 'input window, operand 2, single buffered']
    #allocation5 [shape = 's32[1]{0}', space=sflag, size = 0x4, scoped, tag = 'scoped memory for jsb_chorales_forward.1']
    %9 = vsyncpa [#allocation3], 0
    %10 = vsyncpa [#allocation5], 0
    // Predicated region
    $region2: #{jsb_chorales_forward.1} parent=1 // pred_check
      _
    $region3: #{jsb_chorales_forward.1} parent=1 // pred_check_branch
      %12 = sbr.rel (0) target = $region5
    $region4: #{jsb_chorales_forward.1} parent=1 // pred_region
      _
    $region5: #{jsb_chorales_forward.1} parent=1 // pred_fallthru
      _
    // Predicated region
    $region6: #{jsb_chorales_forward.1} parent=1 // pred_check
      _
    $region7: #{jsb_chorales_forward.1} parent=1 // pred_check_branch
      %14 = sbr.rel (0) target = $region9
    $region8: #{jsb_chorales_forward.1} parent=1 // pred_region
      %s16 = ssub.s32 4096, 4096
      %17 = vsyncadd [#allocation3], %s16
      %s18 = sshll.u32 [#allocation2], 4
      %s19 = int_to_ptr.vmem [resolvable:$true] %s18
      %24 = dma.hbm_to_vmem [thread:$0]  %s1, 4096, %s19, [#allocation3], 256, 256, 16
    $region9: #{jsb_chorales_forward.1} parent=1 // pred_fallthru
      _
    // Predicated region
    $region10: #{jsb_chorales_forward.1} parent=1 // pred_check
      _
    $region11: #{jsb_chorales_forward.1} parent=1 // pred_check_branch
      %26 = sbr.rel (0) target = $region13
    $region12: #{jsb_chorales_forward.1} parent=1 // pred_region
      %s28 = ssub.s32 4096, 4096
      %29 = vsyncadd [#allocation5], %s28
      %s30 = sshll.u32 [#allocation4], 4
      %s31 = int_to_ptr.vmem [resolvable:$true] %s30
      %36 = dma.hbm_to_vmem [thread:$0]  %s2, 4096, %s31, [#allocation5], 256, 256, 16
    $region13: #{jsb_chorales_forward.1} parent=1 // pred_fallthru
      _
    // Predicated region
    $region14: #{jsb_chorales_forward.1} parent=1 // pred_check
      _
    $region15: #{jsb_chorales_forward.1} parent=1 // pred_check_branch
      %38 = sbr.rel (0) target = $region17
    $region16: #{jsb_chorales_forward.1} parent=1 // pred_region
      _
    $region17: #{jsb_chorales_forward.1} parent=1 // pred_fallthru
      _
    // Predicated region
    $region18: #{jsb_chorales_forward.1} parent=1 // pred_check
      _
    $region19: #{jsb_chorales_forward.1} parent=1 // pred_check_branch
      %40 = sbr.rel (0) target = $region21
    $region20: #{jsb_chorales_forward.1} parent=1 // pred_region
      %41 = dma.done [#allocation3], 4096
    $region21: #{jsb_chorales_forward.1} parent=1 // pred_fallthru
      _
    // Predicated region
    $region22: #{jsb_chorales_forward.1} parent=1 // pred_check
      _
    $region23: #{jsb_chorales_forward.1} parent=1 // pred_check_branch
      %43 = sbr.rel (0) target = $region25
    $region24: #{jsb_chorales_forward.1} parent=1 // pred_region
      %44 = dma.done [#allocation5], 4096
    $region25: #{jsb_chorales_forward.1} parent=1 // pred_fallthru
      _
    %v46 = vld [vmem:[%s0] sm:$0xf]
    %v47 = vld [vmem:[%s0 + $0x4] sm:$0xf]
    %v48 = vld [vmem:[#allocation2] sm:$0xff]
    %v49 = vld [vmem:[#allocation2 + $0x8] sm:$0xff]
    %v50 = vld [vmem:[#allocation2 + $0x10] sm:$0xff]
    %v51 = vld [vmem:[#allocation2 + $0x18] sm:$0xff]
    %v52 = vld [vmem:[#allocation2 + $0x20] sm:$0xff]
    %v53 = vld [vmem:[#allocation2 + $0x28] sm:$0xff]
    %v54 = vld [vmem:[#allocation2 + $0x30] sm:$0xff]
    %v55 = vld [vmem:[#allocation2 + $0x38] sm:$0xff]
    %v56 = vld [vmem:[#allocation2 + $0x40] sm:$0xff]
    %v57 = vld [vmem:[#allocation2 + $0x48] sm:$0xff]
    %v58 = vld [vmem:[#allocation2 + $0x50] sm:$0xff]
    %v59 = vld [vmem:[#allocation2 + $0x58] sm:$0xff]
    %v60 = vld [vmem:[#allocation2 + $0x60] sm:$0xff]
    %v61 = vld [vmem:[#allocation2 + $0x68] sm:$0xff]
    %v62 = vld [vmem:[#allocation2 + $0x70] sm:$0xff]
    %v63 = vld [vmem:[#allocation2 + $0x78] sm:$0xff]
    %v64 = vld [vmem:[#allocation2 + $0x80] sm:$0xff]
    %v65 = vld [vmem:[#allocation2 + $0x88] sm:$0xff]
    %v66 = vld [vmem:[#allocation2 + $0x90] sm:$0xff]
    %v67 = vld [vmem:[#allocation2 + $0x98] sm:$0xff]
    %v68 = vld [vmem:[#allocation2 + $0xa0] sm:$0xff]
    %v69 = vld [vmem:[#allocation2 + $0xa8] sm:$0xff]
    %v70 = vld [vmem:[#allocation2 + $0xb0] sm:$0xff]
    %v71 = vld [vmem:[#allocation2 + $0xb8] sm:$0xff]
    %v72 = vld [vmem:[#allocation2 + $0xc0] sm:$0xff]
    %v73 = vld [vmem:[#allocation2 + $0xc8] sm:$0xff]
    %v74 = vld [vmem:[#allocation2 + $0xd0] sm:$0xff]
    %v75 = vld [vmem:[#allocation2 + $0xd8] sm:$0xff]
    %v76 = vld [vmem:[#allocation2 + $0xe0] sm:$0xff]
    %v77 = vld [vmem:[#allocation2 + $0xe8] sm:$0xff]
    %v78 = vld [vmem:[#allocation2 + $0xf0] sm:$0xff]
    %v79 = vld [vmem:[#allocation2 + $0xf8] sm:$0xff]
    %v80 = vld [vmem:[%s3] sm:$0xf]
    %v82 = vlaneseq
    %v83 = vshrl.u32 %v82, 7
    %v84 = vsub.s32 0, %v83
    %v85 = vrot.slane %v80, %v84
    %v86 = vlaneseq
    %v87 = vshrl.u32 %v86, 7
    %v88 = vsub.s32 1, %v87
    %v89 = vrot.slane %v80, %v88
    %v90 = vlaneseq
    %v91 = vshrl.u32 %v90, 7
    %v92 = vsub.s32 2, %v91
    %v93 = vrot.slane %v80, %v92
    %v94 = vlaneseq
    %v95 = vshrl.u32 %v94, 7
    %v96 = vsub.s32 3, %v95
    %v97 = vrot.slane %v80, %v96
    %v104 = vunpack.c.l.b16 %v46
    %v105 = vunpack.c.l.b16 %v47
    %v106 = vpack.c.b16 %v105, %v104
    %v140 = vunpack.c.l.b16 %v48
    %v141 = vunpack.c.h.b16 %v48
    %v142 = vunpack.c.l.b16 %v49
    %v143 = vunpack.c.h.b16 %v49
    %v144 = vunpack.c.l.b16 %v50
    %v145 = vunpack.c.h.b16 %v50
    %v146 = vunpack.c.l.b16 %v51
    %v147 = vunpack.c.h.b16 %v51
    %v148 = vunpack.c.l.b16 %v52
    %v149 = vunpack.c.h.b16 %v52
    %v150 = vunpack.c.l.b16 %v53
    %v151 = vunpack.c.h.b16 %v53
    %v152 = vunpack.c.l.b16 %v54
    %v153 = vunpack.c.h.b16 %v54
    %v154 = vunpack.c.l.b16 %v55
    %v155 = vunpack.c.h.b16 %v55
    %v156 = vunpack.c.l.b16 %v56
    %v157 = vunpack.c.h.b16 %v56
    %v158 = vunpack.c.l.b16 %v57
    %v159 = vunpack.c.h.b16 %v57
    %v160 = vunpack.c.l.b16 %v58
    %v161 = vunpack.c.h.b16 %v58
    %v162 = vunpack.c.l.b16 %v59
    %v163 = vunpack.c.h.b16 %v59
    %v164 = vunpack.c.l.b16 %v60
    %v165 = vunpack.c.h.b16 %v60
    %v166 = vunpack.c.l.b16 %v61
    %v167 = vunpack.c.h.b16 %v61
    %v168 = vunpack.c.l.b16 %v62
    %v169 = vunpack.c.h.b16 %v62
    %v170 = vunpack.c.l.b16 %v63
    %v171 = vunpack.c.h.b16 %v63
    %v172 = vunpack.c.l.b16 %v64
    %v173 = vunpack.c.h.b16 %v64
    %v174 = vunpack.c.l.b16 %v65
    %v175 = vunpack.c.h.b16 %v65
    %v176 = vunpack.c.l.b16 %v66
    %v177 = vunpack.c.h.b16 %v66
    %v178 = vunpack.c.l.b16 %v67
    %v179 = vunpack.c.h.b16 %v67
    %v180 = vunpack.c.l.b16 %v68
    %v181 = vunpack.c.h.b16 %v68
    %v182 = vunpack.c.l.b16 %v69
    %v183 = vunpack.c.h.b16 %v69
    %v184 = vunpack.c.l.b16 %v70
    %v185 = vunpack.c.h.b16 %v70
    %v186 = vunpack.c.l.b16 %v71
    %v187 = vunpack.c.h.b16 %v71
    %v188 = vunpack.c.l.b16 %v72
    %v189 = vunpack.c.h.b16 %v72
    %v190 = vunpack.c.l.b16 %v73
    %v191 = vunpack.c.h.b16 %v73
    %v192 = vunpack.c.l.b16 %v74
    %v193 = vunpack.c.h.b16 %v74
    %v194 = vunpack.c.l.b16 %v75
    %v195 = vunpack.c.h.b16 %v75
    %v196 = vunpack.c.l.b16 %v76
    %v197 = vunpack.c.h.b16 %v76
    %v198 = vunpack.c.l.b16 %v77
    %v199 = vunpack.c.h.b16 %v77
    %v200 = vunpack.c.l.b16 %v78
    %v201 = vunpack.c.h.b16 %v78
    %v202 = vunpack.c.l.b16 %v79
    %v203 = vunpack.c.h.b16 %v79
    %v204 = vpack.c.b16 %v144, %v140
    %v205 = vpack.c.b16 %v145, %v141
    %v206 = vpack.c.b16 %v146, %v142
    %v207 = vpack.c.b16 %v147, %v143
    %v208 = vpack.c.b16 %v152, %v148
    %v209 = vpack.c.b16 %v153, %v149
    %v210 = vpack.c.b16 %v154, %v150
    %v211 = vpack.c.b16 %v155, %v151
    %v212 = vpack.c.b16 %v160, %v156
    %v213 = vpack.c.b16 %v161, %v157
    %v214 = vpack.c.b16 %v162, %v158
    %v215 = vpack.c.b16 %v163, %v159
    %v216 = vpack.c.b16 %v168, %v164
    %v217 = vpack.c.b16 %v169, %v165
    %v218 = vpack.c.b16 %v170, %v166
    %v219 = vpack.c.b16 %v171, %v167
    %v220 = vpack.c.b16 %v176, %v172
    %v221 = vpack.c.b16 %v177, %v173
    %v222 = vpack.c.b16 %v178, %v174
    %v223 = vpack.c.b16 %v179, %v175
    %v224 = vpack.c.b16 %v184, %v180
    %v225 = vpack.c.b16 %v185, %v181
    %v226 = vpack.c.b16 %v186, %v182
    %v227 = vpack.c.b16 %v187, %v183
    %v228 = vpack.c.b16 %v192, %v188
    %v229 = vpack.c.b16 %v193, %v189
    %v230 = vpack.c.b16 %v194, %v190
    %v231 = vpack.c.b16 %v195, %v191
    %v232 = vpack.c.b16 %v200, %v196
    %v233 = vpack.c.b16 %v201, %v197
    %v234 = vpack.c.b16 %v202, %v198
    %v235 = vpack.c.b16 %v203, %v199
    %268 = vmatprep.subr.bf16.mxu0 %v205
    %269 = vmatpush1.bf16.msra.mxu0 %v204
    %270 = vmatprep.subr.bf16.mxu0 %v209
    %271 = vmatpush1.bf16.msra.mxu0 %v208
    %272 = vmatprep.subr.bf16.mxu0 %v213
    %273 = vmatpush1.bf16.msra.mxu0 %v212
    %274 = vmatprep.subr.bf16.mxu0 %v217
    %275 = vmatpush1.bf16.msra.mxu0 %v216
    %276 = vmatprep.subr.bf16.mxu0 %v221
    %277 = vmatpush1.bf16.msra.mxu0 %v220
    %278 = vmatprep.subr.bf16.mxu0 %v225
    %279 = vmatpush1.bf16.msra.mxu0 %v224
    %280 = vmatprep.subr.bf16.mxu0 %v229
    %281 = vmatpush1.bf16.msra.mxu0 %v228
    %282 = vmatprep.subr.bf16.mxu0 %v233
    %283 = vmatpush1.bf16.msra.mxu0 %v232
    %284 = vmatprep.subr.bf16.mxu0 0
    %285 = vmatpush1.bf16.msra.mxu0 0
    %286 = vmatprep.subr.bf16.mxu0 0
    %287 = vmatpush1.bf16.msra.mxu0 0
    %288 = vmatprep.subr.bf16.mxu0 0
    %289 = vmatpush1.bf16.msra.mxu0 0
    %290 = vmatprep.subr.bf16.mxu0 0
    %291 = vmatpush1.bf16.msra.mxu0 0
    %292 = vmatprep.subr.bf16.mxu0 0
    %293 = vmatpush1.bf16.msra.mxu0 0
    %294 = vmatprep.subr.bf16.mxu0 0
    %295 = vmatpush1.bf16.msra.mxu0 0
    %296 = vmatprep.subr.bf16.mxu0 0
    %297 = vmatpush1.bf16.msra.mxu0 0
    %298 = vmatprep.subr.bf16.mxu0 0
    %299 = vmatpush1.bf16.msra.mxu0 0
    %300 = vmatprep.mubr.bf16.mxu0 0
    %301 = vmatmul.mubr.bf16.gmra.mrb[0].mxu0 %v106
    %v302 = vpop.f32.mrb[0].mxu0
    %v303 = vadd.f32 %v85, %v302
    %v304 = vpop.f32.mrb[0].mxu0
    %v305 = vpop.f32.mrb[0].mxu0
    %v306 = vadd.f32 %v85, %v305
    %v307 = vpop.f32.mrb[0].mxu0
    %v308 = vadd.f32 %v89, %v307
    %309 = vdwg.mxu0
    %310 = vmatprep.subr.bf16.mxu0 %v207
    %311 = vmatpush1.bf16.msra.mxu0 %v206
    %312 = vmatprep.subr.bf16.mxu0 %v211
    %313 = vmatpush1.bf16.msra.mxu0 %v210
    %314 = vmatprep.subr.bf16.mxu0 %v215
    %315 = vmatpush1.bf16.msra.mxu0 %v214
    %316 = vmatprep.subr.bf16.mxu0 %v219
    %317 = vmatpush1.bf16.msra.mxu0 %v218
    %318 = vmatprep.subr.bf16.mxu0 %v223
    %319 = vmatpush1.bf16.msra.mxu0 %v222
    %320 = vmatprep.subr.bf16.mxu0 %v227
    %321 = vmatpush1.bf16.msra.mxu0 %v226
    %322 = vmatprep.subr.bf16.mxu0 %v231
    %323 = vmatpush1.bf16.msra.mxu0 %v230
    %324 = vmatprep.subr.bf16.mxu0 %v235
    %325 = vmatpush1.bf16.msra.mxu0 %v234
    %326 = vmatprep.subr.bf16.mxu0 0
    %327 = vmatpush1.bf16.msra.mxu0 0
    %328 = vmatprep.subr.bf16.mxu0 0
    %329 = vmatpush1.bf16.msra.mxu0 0
    %330 = vmatprep.subr.bf16.mxu0 0
    %331 = vmatpush1.bf16.msra.mxu0 0
    %332 = vmatprep.subr.bf16.mxu0 0
    %333 = vmatpush1.bf16.msra.mxu0 0
    %334 = vmatprep.subr.bf16.mxu0 0
    %335 = vmatpush1.bf16.msra.mxu0 0
    %336 = vmatprep.subr.bf16.mxu0 0
    %337 = vmatpush1.bf16.msra.mxu0 0
    %338 = vmatprep.subr.bf16.mxu0 0
    %339 = vmatpush1.bf16.msra.mxu0 0
    %340 = vmatprep.subr.bf16.mxu0 0
    %341 = vmatpush1.bf16.msra.mxu0 0
    %342 = vmatprep.mubr.bf16.mxu0 0
    %343 = vmatmul.mubr.bf16.gmra.mrb[0].mxu0 %v106
    %v344 = vpop.f32.mrb[0].mxu0
    %v345 = vadd.f32 %v93, %v344
    %v346 = vpop.f32.mrb[0].mxu0
    %v347 = vadd.f32 %v97, %v346
    %v348 = vpop.f32.mrb[0].mxu0
    %v349 = vadd.f32 %v93, %v348
    %v350 = vpop.f32.mrb[0].mxu0
    %v351 = vadd.f32 %v97, %v350
    %352 = vdwg.mxu0
    %v353 = vxor.u32 %v303, 2147483648
    %v354 = vxor.u32 %v345, 2147483648
    %v355 = vmul.f32 %v353, 1.442695
    %v356 = vpow.pop %v355
    %v357 = vmul.f32 %v354, 1.442695
    %v358 = vpow.pop %v357
    %v359 = vadd.f32 %v356, 1.0
    %v360 = vadd.f32 %v358, 1.0
    %v361 = vrcp.pop %v359
    %v362 = vmul.f32 1.0, %v361
    %v363 = vrcp.pop %v360
    %v364 = vmul.f32 1.0, %v363
    %v365 = vtanh.pop %v347
    %v366 = vmul.f32 %v362, %v365
    %v367 = vtanh.pop %v366
    %v368 = vmul.f32 %v364, %v367
    %v369 = vpack.c.bf16 %v368, %v368
    %v370 = vld [vmem:[#allocation4] sm:$0xff]
    %v371 = vld [vmem:[#allocation4 + $0x8] sm:$0xff]
    %v372 = vld [vmem:[#allocation4 + $0x10] sm:$0xff]
    %v373 = vld [vmem:[#allocation4 + $0x18] sm:$0xff]
    %v374 = vld [vmem:[#allocation4 + $0x20] sm:$0xff]
    %v375 = vld [vmem:[#allocation4 + $0x28] sm:$0xff]
    %v376 = vld [vmem:[#allocation4 + $0x30] sm:$0xff]
    %v377 = vld [vmem:[#allocation4 + $0x38] sm:$0xff]
    %v378 = vld [vmem:[#allocation4 + $0x40] sm:$0xff]
    %v379 = vld [vmem:[#allocation4 + $0x48] sm:$0xff]
    %v380 = vld [vmem:[#allocation4 + $0x50] sm:$0xff]
    %v381 = vld [vmem:[#allocation4 + $0x58] sm:$0xff]
    %v382 = vld [vmem:[#allocation4 + $0x60] sm:$0xff]
    %v383 = vld [vmem:[#allocation4 + $0x68] sm:$0xff]
    %v384 = vld [vmem:[#allocation4 + $0x70] sm:$0xff]
    %v385 = vld [vmem:[#allocation4 + $0x78] sm:$0xff]
    %v386 = vld [vmem:[#allocation4 + $0x80] sm:$0xff]
    %v387 = vld [vmem:[#allocation4 + $0x88] sm:$0xff]
    %v388 = vld [vmem:[#allocation4 + $0x90] sm:$0xff]
    %v389 = vld [vmem:[#allocation4 + $0x98] sm:$0xff]
    %v390 = vld [vmem:[#allocation4 + $0xa0] sm:$0xff]
    %v391 = vld [vmem:[#allocation4 + $0xa8] sm:$0xff]
    %v392 = vld [vmem:[#allocation4 + $0xb0] sm:$0xff]
    %v393 = vld [vmem:[#allocation4 + $0xb8] sm:$0xff]
    %v394 = vld [vmem:[#allocation4 + $0xc0] sm:$0xff]
    %v395 = vld [vmem:[#allocation4 + $0xc8] sm:$0xff]
    %v396 = vld [vmem:[#allocation4 + $0xd0] sm:$0xff]
    %v397 = vld [vmem:[#allocation4 + $0xd8] sm:$0xff]
    %v398 = vld [vmem:[#allocation4 + $0xe0] sm:$0xff]
    %v399 = vld [vmem:[#allocation4 + $0xe8] sm:$0xff]
    %v400 = vld [vmem:[#allocation4 + $0xf0] sm:$0xff]
    %v401 = vld [vmem:[#allocation4 + $0xf8] sm:$0xff]
    %v434 = vunpack.c.l.b16 %v370
    %v435 = vunpack.c.h.b16 %v370
    %v436 = vunpack.c.l.b16 %v371
    %v437 = vunpack.c.h.b16 %v371
    %v438 = vunpack.c.l.b16 %v372
    %v439 = vunpack.c.h.b16 %v372
    %v440 = vunpack.c.l.b16 %v373
    %v441 = vunpack.c.h.b16 %v373
    %v442 = vunpack.c.l.b16 %v374
    %v443 = vunpack.c.h.b16 %v374
    %v444 = vunpack.c.l.b16 %v375
    %v445 = vunpack.c.h.b16 %v375
    %v446 = vunpack.c.l.b16 %v376
    %v447 = vunpack.c.h.b16 %v376
    %v448 = vunpack.c.l.b16 %v377
    %v449 = vunpack.c.h.b16 %v377
    %v450 = vunpack.c.l.b16 %v378
    %v451 = vunpack.c.h.b16 %v378
    %v452 = vunpack.c.l.b16 %v379
    %v453 = vunpack.c.h.b16 %v379
    %v454 = vunpack.c.l.b16 %v380
    %v455 = vunpack.c.h.b16 %v380
    %v456 = vunpack.c.l.b16 %v381
    %v457 = vunpack.c.h.b16 %v381
    %v458 = vunpack.c.l.b16 %v382
    %v459 = vunpack.c.h.b16 %v382
    %v460 = vunpack.c.l.b16 %v383
    %v461 = vunpack.c.h.b16 %v383
    %v462 = vunpack.c.l.b16 %v384
    %v463 = vunpack.c.h.b16 %v384
    %v464 = vunpack.c.l.b16 %v385
    %v465 = vunpack.c.h.b16 %v385
    %v466 = vunpack.c.l.b16 %v386
    %v467 = vunpack.c.h.b16 %v386
    %v468 = vunpack.c.l.b16 %v387
    %v469 = vunpack.c.h.b16 %v387
    %v470 = vunpack.c.l.b16 %v388
    %v471 = vunpack.c.h.b16 %v388
    %v472 = vunpack.c.l.b16 %v389
    %v473 = vunpack.c.h.b16 %v389
    %v474 = vunpack.c.l.b16 %v390
    %v475 = vunpack.c.h.b16 %v390
    %v476 = vunpack.c.l.b16 %v391
    %v477 = vunpack.c.h.b16 %v391
    %v478 = vunpack.c.l.b16 %v392
    %v479 = vunpack.c.h.b16 %v392
    %v480 = vunpack.c.l.b16 %v393
    %v481 = vunpack.c.h.b16 %v393
    %v482 = vunpack.c.l.b16 %v394
    %v483 = vunpack.c.h.b16 %v394
    %v484 = vunpack.c.l.b16 %v395
    %v485 = vunpack.c.h.b16 %v395
    %v486 = vunpack.c.l.b16 %v396
    %v487 = vunpack.c.h.b16 %v396
    %v488 = vunpack.c.l.b16 %v397
    %v489 = vunpack.c.h.b16 %v397
    %v490 = vunpack.c.l.b16 %v398
    %v491 = vunpack.c.h.b16 %v398
    %v492 = vunpack.c.l.b16 %v399
    %v493 = vunpack.c.h.b16 %v399
    %v494 = vunpack.c.l.b16 %v400
    %v495 = vunpack.c.h.b16 %v400
    %v496 = vunpack.c.l.b16 %v401
    %v497 = vunpack.c.h.b16 %v401
    %v498 = vpack.c.b16 %v438, %v434
    %v499 = vpack.c.b16 %v439, %v435
    %v500 = vpack.c.b16 %v440, %v436
    %v501 = vpack.c.b16 %v441, %v437
    %v502 = vpack.c.b16 %v446, %v442
    %v503 = vpack.c.b16 %v447, %v443
    %v504 = vpack.c.b16 %v448, %v444
    %v505 = vpack.c.b16 %v449, %v445
    %v506 = vpack.c.b16 %v454, %v450
    %v507 = vpack.c.b16 %v455, %v451
    %v508 = vpack.c.b16 %v456, %v452
    %v509 = vpack.c.b16 %v457, %v453
    %v510 = vpack.c.b16 %v462, %v458
    %v511 = vpack.c.b16 %v463, %v459
    %v512 = vpack.c.b16 %v464, %v460
    %v513 = vpack.c.b16 %v465, %v461
    %v514 = vpack.c.b16 %v470, %v466
    %v515 = vpack.c.b16 %v471, %v467
    %v516 = vpack.c.b16 %v472, %v468
    %v517 = vpack.c.b16 %v473, %v469
    %v518 = vpack.c.b16 %v478, %v474
    %v519 = vpack.c.b16 %v479, %v475
    %v520 = vpack.c.b16 %v480, %v476
    %v521 = vpack.c.b16 %v481, %v477
    %v522 = vpack.c.b16 %v486, %v482
    %v523 = vpack.c.b16 %v487, %v483
    %v524 = vpack.c.b16 %v488, %v484
    %v525 = vpack.c.b16 %v489, %v485
    %v526 = vpack.c.b16 %v494, %v490
    %v527 = vpack.c.b16 %v495, %v491
    %v528 = vpack.c.b16 %v496, %v492
    %v529 = vpack.c.b16 %v497, %v493
    %562 = vmatprep.subr.bf16.mxu0 %v499
    %563 = vmatpush1.bf16.msra.mxu0 %v498
    %564 = vmatprep.subr.bf16.mxu0 %v503
    %565 = vmatpush1.bf16.msra.mxu0 %v502
    %566 = vmatprep.subr.bf16.mxu0 %v507
    %567 = vmatpush1.bf16.msra.mxu0 %v506
    %568 = vmatprep.subr.bf16.mxu0 %v511
    %569 = vmatpush1.bf16.msra.mxu0 %v510
    %570 = vmatprep.subr.bf16.mxu0 %v515
    %571 = vmatpush1.bf16.msra.mxu0 %v514
    %572 = vmatprep.subr.bf16.mxu0 %v519
    %573 = vmatpush1.bf16.msra.mxu0 %v518
    %574 = vmatprep.subr.bf16.mxu0 %v523
    %575 = vmatpush1.bf16.msra.mxu0 %v522
    %576 = vmatprep.subr.bf16.mxu0 %v527
    %577 = vmatpush1.bf16.msra.mxu0 %v526
    %578 = vmatprep.subr.bf16.mxu0 0
    %579 = vmatpush1.bf16.msra.mxu0 0
    %580 = vmatprep.subr.bf16.mxu0 0
    %581 = vmatpush1.bf16.msra.mxu0 0
    %582 = vmatprep.subr.bf16.mxu0 0
    %583 = vmatpush1.bf16.msra.mxu0 0
    %584 = vmatprep.subr.bf16.mxu0 0
    %585 = vmatpush1.bf16.msra.mxu0 0
    %586 = vmatprep.subr.bf16.mxu0 0
    %587 = vmatpush1.bf16.msra.mxu0 0
    %588 = vmatprep.subr.bf16.mxu0 0
    %589 = vmatpush1.bf16.msra.mxu0 0
    %590 = vmatprep.subr.bf16.mxu0 0
    %591 = vmatpush1.bf16.msra.mxu0 0
    %592 = vmatprep.subr.bf16.mxu0 0
    %593 = vmatpush1.bf16.msra.mxu0 0
    %594 = vmatprep.mubr.bf16.mxu0 0
    %595 = vmatmul.mubr.bf16.gmra.mrb[0].mxu0 %v369
    %v596 = vpop.f32.mrb[0].mxu0
    %v597 = vadd.f32 0.0, %v596
    %v598 = vpop.f32.mrb[0].mxu0
    %v599 = vadd.f32 0.0, %v598
    %v600 = vpop.f32.mrb[0].mxu0
    %v601 = vpop.f32.mrb[0].mxu0
    %602 = vdwg.mxu0
    %603 = vmatprep.subr.bf16.mxu0 %v501
    %604 = vmatpush1.bf16.msra.mxu0 %v500
    %605 = vmatprep.subr.bf16.mxu0 %v505
    %606 = vmatpush1.bf16.msra.mxu0 %v504
    %607 = vmatprep.subr.bf16.mxu0 %v509
    %608 = vmatpush1.bf16.msra.mxu0 %v508
    %609 = vmatprep.subr.bf16.mxu0 %v513
    %610 = vmatpush1.bf16.msra.mxu0 %v512
    %611 = vmatprep.subr.bf16.mxu0 %v517
    %612 = vmatpush1.bf16.msra.mxu0 %v516
    %613 = vmatprep.subr.bf16.mxu0 %v521
    %614 = vmatpush1.bf16.msra.mxu0 %v520
    %615 = vmatprep.subr.bf16.mxu0 %v525
    %616 = vmatpush1.bf16.msra.mxu0 %v524
    %617 = vmatprep.subr.bf16.mxu0 %v529
    %618 = vmatpush1.bf16.msra.mxu0 %v528
    %619 = vmatprep.subr.bf16.mxu0 0
    %620 = vmatpush1.bf16.msra.mxu0 0
    %621 = vmatprep.subr.bf16.mxu0 0
    %622 = vmatpush1.bf16.msra.mxu0 0
    %623 = vmatprep.subr.bf16.mxu0 0
    %624 = vmatpush1.bf16.msra.mxu0 0
    %625 = vmatprep.subr.bf16.mxu0 0
    %626 = vmatpush1.bf16.msra.mxu0 0
    %627 = vmatprep.subr.bf16.mxu0 0
    %628 = vmatpush1.bf16.msra.mxu0 0
    %629 = vmatprep.subr.bf16.mxu0 0
    %630 = vmatpush1.bf16.msra.mxu0 0
    %631 = vmatprep.subr.bf16.mxu0 0
    %632 = vmatpush1.bf16.msra.mxu0 0
    %633 = vmatprep.subr.bf16.mxu0 0
    %634 = vmatpush1.bf16.msra.mxu0 0
    %635 = vmatprep.mubr.bf16.mxu0 0
    %636 = vmatmul.mubr.bf16.gmra.mrb[0].mxu0 %v369
    %v637 = vpop.f32.mrb[0].mxu0
    %v638 = vadd.f32 0.0, %v637
    %v639 = vpop.f32.mrb[0].mxu0
    %v640 = vadd.f32 0.0, %v639
    %v641 = vpop.f32.mrb[0].mxu0
    %v642 = vpop.f32.mrb[0].mxu0
    %643 = vdwg.mxu0
    %v644 = vadd.f32 %v306, %v597
    %v645 = vadd.f32 %v308, %v599
    %v646 = vadd.f32 %v349, %v638
    %v647 = vadd.f32 %v351, %v640
    %v648 = vxor.u32 %v644, 2147483648
    %v649 = vxor.u32 %v645, 2147483648
    %v650 = vxor.u32 %v646, 2147483648
    %v651 = vmul.f32 %v648, 1.442695
    %v652 = vpow.pop %v651
    %v653 = vmul.f32 %v649, 1.442695
    %v654 = vpow.pop %v653
    %v655 = vmul.f32 %v650, 1.442695
    %v656 = vpow.pop %v655
    %v657 = vadd.f32 %v652, 1.0
    %v658 = vadd.f32 %v654, 1.0
    %v659 = vadd.f32 %v656, 1.0
    %v660 = vrcp.pop %v657
    %v661 = vmul.f32 1.0, %v660
    %v662 = vrcp.pop %v658
    %v663 = vmul.f32 1.0, %v662
    %v664 = vrcp.pop %v659
    %v665 = vmul.f32 1.0, %v664
    %v666 = vtanh.pop %v647
    %v667 = vmul.f32 %v663, %v366
    %v668 = vmul.f32 %v661, %v666
    %v669 = vadd.f32 %v667, %v668
    %v670 = vtanh.pop %v669
    %v671 = vmul.f32 %v665, %v670
    %v672 = vxor.u32 %v671, 2147483648
    %v673 = vmul.f32 %v672, 1.442695
    %v674 = vpow.pop %v673
    %v675 = vadd.f32 %v674, 1.0
    %v676 = vrcp.pop %v675
    %v677 = vmul.f32 1.0, %v676
    %678 = vst [vmem:[%s4] sm:$0xff] %v677
    // Predicated region
    $region26: #{jsb_chorales_forward.1} parent=1 // pred_check
      _
    $region27: #{jsb_chorales_forward.1} parent=1 // pred_check_branch
      %680 = sbr.rel (0) target = $region29
    $region28: #{jsb_chorales_forward.1} parent=1 // pred_region
      _
    $region29: #{jsb_chorales_forward.1} parent=1 // pred_fallthru
      _
    // Predicated region
    $region30: #{jsb_chorales_forward.1} parent=1 // pred_check
      _
    $region31: #{jsb_chorales_forward.1} parent=1 // pred_check_branch
      %682 = sbr.rel (0) target = $region33
    $region32: #{jsb_chorales_forward.1} parent=1 // pred_region
      _
    $region33: #{jsb_chorales_forward.1} parent=1 // pred_fallthru
      _
    %683 = vsyncpa [#allocation3], 1
    %684 = vsyncpa [#allocation5], 1

</llo_original>
